<compile_context>
chip_gen: v6e
topology: v6e:2x2x1
jax: 0.10.0
libtpu: 0.0.40
codegen_flags: <defaults>
</compile_context>

<pallas_src>
import numpy as np
import jax
import jax.numpy as jnp
from jax import lax
from jax.experimental import pallas as pl
from jax.experimental.pallas import tpu as pltpu


# ---------------------------------------------------------------------------
# Host-side constant construction (done once, outside the kernel).
# ---------------------------------------------------------------------------

def _row_col_matrices(H, W, k1, k2, pad_t, pad_l):
    """Averaging matrices R (H_out x H_in) and C (W_out x W_in).

    out = R @ x @ C.T reproduces k1 x k2 window means with window starts
    clamped exactly like the replicate ("edge") padding of the reference
    (cumsum + 4-corner differences + replicate pad).  The 1/(k1*k2) scale is
    folded in (1/k1 into R, 1/k2 into C) so the kernel has no extra multiply.
    """
    i = np.arange(H)[:, None]
    h = np.arange(H)[None, :]
    ri = np.clip(i - pad_t, 0, H - k1)
    R = ((h >= ri) & (h < ri + k1)).astype(np.float32) / float(k1)

    j = np.arange(W)[:, None]
    w = np.arange(W)[None, :]
    cj = np.clip(j - pad_l, 0, W - k2)
    C = ((w >= cj) & (w < cj + k2)).astype(np.float32) / float(k2)
    return R, C


def _choose_batch(nc, slab_bytes, sublane_mult, *, need_aligned,
                  max_block_bytes=4 << 20, min_steps=4):
    """Pick batch B (a divisor of nc) for (B, ...) blocks.

    Preference order (per review):
      * correctness: when need_aligned, B is a multiple of the sublane packing
        OR B == nc (block spans the full axis), so the (8,128) second-minor
        BlockSpec rule always holds;
      * one block fits the ~4 MiB HBM-bound sweet spot (amortizes the ~0.35 us
        per-grid-step overhead);
      * >= min_steps grid steps (>= 2 per TensorCore on v7x) with an even step
        count preferred (equal split across v7x's two cores);
      * then the largest block.
    """
    divisors = [b for b in range(1, nc + 1) if nc % b == 0]
    if need_aligned:
        aligned = [b for b in divisors if (b % sublane_mult == 0) or (b == nc)]
        divisors = aligned if aligned else [nc]
    fits = [b for b in divisors if b * slab_bytes <= max_block_bytes]
    if not fits:
        return min(divisors)          # correctness first: smallest legal block

    def score(b):
        steps = nc // b
        return (steps >= min_steps, steps % 2 == 0, b)

    return max(fits, key=score)


def _vmem_limit_bytes(block_bytes, const_bytes):
    # Double-buffered in+out blocks, (worst case double-buffered) resident
    # constants, plus headroom for in-kernel temporaries.  Kept well under the
    # 64 MiB physical VMEM of v7x; raises v5e's 16 MiB scoped default.
    need = 8 * block_bytes + 2 * const_bytes + (2 << 20)
    return int(min(max(need, 24 << 20), 48 << 20))


def _resident_spec(shape, single_buffer):
    """BlockSpec for a constant that stays resident across all grid steps."""
    ndim = len(shape)
    index_map = lambda *_: (0,) * ndim
    if single_buffer:
        # Constant index_map => never re-DMA'd; single-buffer it to free VMEM.
        return pl.BlockSpec(shape, index_map, pipeline_mode=pl.Buffered(1))
    return pl.BlockSpec(shape, index_map)


# ---------------------------------------------------------------------------
# Kernels.
# ---------------------------------------------------------------------------

def _kron_kernel(x_ref, kt_ref, o_ref):
    # x: (B, H*W) lane-dense, kt: (H*W, H*W) resident constant, o: (B, H*W).
    # One lane-dense MXU matmul; scale already folded into kt.
    o_ref[...] = jnp.dot(
        x_ref[...], kt_ref[...], preferred_element_type=jnp.float32
    ).astype(o_ref.dtype)


def _sep_kernel_fused(x_ref, rt_ref, ct_ref, o_ref):
    # Separable path: two *fused* tall MXU matmuls over the whole (B, H, W)
    # block (no per-channel small matmuls / MXU drains), with per-slab XLU
    # transposes to put each pass's contraction dim on the lane axis.
    B, H, W = x_ref.shape
    xb = x_ref[...]
    ct = ct_ref[...]                                  # (W_in, W_out) = C.T
    rt = rt_ref[...]                                  # (H_in, H_out) = R.T
    # Column (W) pass: one matmul for the whole block.
    y = jnp.dot(xb.reshape(B * H, W), ct,
                preferred_element_type=jnp.float32).astype(ct.dtype)
    # Row (H) pass: per-slab transpose so H is the contraction (lane) dim,
    # one matmul for the whole block, transpose back.
    yt = jnp.transpose(y.reshape(B, H, W), (0, 2, 1)).reshape(B * W, H)
    zt = jnp.dot(yt, rt, preferred_element_type=jnp.float32)
    z = jnp.transpose(zt.reshape(B, W, H), (0, 2, 1))  # (B, H, W)
    o_ref[...] = z.astype(o_ref.dtype)


def _sep_kernel_loop(x_ref, rt_ref, ct_ref, o_ref):
    # Conservative fallback (only used if the fused kernel fails to lower on
    # the installed JAX/Mosaic): per-slab 2-D dots via fori_loop.
    B, H, W = x_ref.shape
    ct = ct_ref[...]
    r = rt_ref[...].T                                  # (H_out, H_in) = R

    def body(b, carry):
        y = jnp.dot(x_ref[b], ct, preferred_element_type=jnp.float32)
        z = jnp.dot(r, y.astype(ct.dtype), preferred_element_type=jnp.float32)
        o_ref[b] = z.astype(o_ref.dtype)
        return carry

    lax.fori_loop(0, B, body, 0)


# ---------------------------------------------------------------------------
# Wrapper.
# ---------------------------------------------------------------------------

def avg_pool2d(x, kernel_size, auto_pad=True):
    """Pallas implementation of AvgPool2d.forward (non-fast path, auto_pad=True)."""
    N, C, H, W = x.shape
    k1 = min(H, int(kernel_size[0]))
    k2 = min(W, int(kernel_size[1]))
    assert auto_pad, "only auto_pad=True (module default) is implemented"
    assert not (k1 >= H and k2 >= W), (
        "global-pool branch (adaptive_avg_pool2d to 1x1) not implemented here")
    # TODO(synk): fast_imp branch (strided cumsum + interpolate) not implemented.
    # TODO(synk): int8/fp8 inputs would need explicit rounding semantics; only
    #             float32 / bfloat16 inputs are exercised here.

    # Replicate-pad geometry from the reference code.
    h_out = H - k1 + 1
    w_out = W - k2 + 1
    pad_t = (H - h_out) // 2          # == (k1 - 1) // 2
    pad_l = (W - w_out) // 2          # == (k2 - 1) // 2

    R, Cm = _row_col_matrices(H, W, k1, k2, pad_t, pad_l)

    nc = N * C
    hw = H * W
    itemsize = jnp.dtype(x.dtype).itemsize
    sublane_mult = max(8, 32 // itemsize)      # f32: 8, bf16: 16, int8/fp8: 32

    # Constants in the input dtype for bf16 (native-rate MXU passes, half the
    # resident footprint); accumulation stays f32 either way.
    if x.dtype == jnp.bfloat16 or x.dtype == jnp.float32:
        const_dtype = x.dtype
    else:
        const_dtype = jnp.float32
    c_itemsize = jnp.dtype(const_dtype).itemsize

    # Kron (single lane-dense matmul) only while it stays HBM-bound: it costs
    # ~2*hw flops/elem vs ~2*(H+W) for the separable path; the f32 MXU-rate /
    # HBM-BW roofline puts the crossover around hw ~ 250 (v5e/v7x) to ~650
    # (v6e) — use a portable cutoff in that band.
    use_kron = hw <= 400

    if use_kron:
        KT = np.ascontiguousarray(np.kron(R, Cm).T)            # (hw, hw)
        kt = jnp.asarray(KT, dtype=const_dtype)
        slab_bytes = hw * itemsize
        B = _choose_batch(nc, slab_bytes, sublane_mult, need_aligned=True)
        grid = (nc // B,)
        x2 = x.reshape(nc, hw)
        vmem_limit = _vmem_limit_bytes(B * hw * itemsize, hw * hw * c_itemsize)

        def build(single_buffer_consts):
            return pl.pallas_call(
                _kron_kernel,
                out_shape=jax.ShapeDtypeStruct((nc, hw), x.dtype),
                grid_spec=pltpu.PrefetchScalarGridSpec(
                    num_scalar_prefetch=0,
                    grid=grid,
                    in_specs=[
                        pl.BlockSpec((B, hw), lambda i: (i, 0)),
                        _resident_spec((hw, hw), single_buffer_consts),
                    ],
                    out_specs=pl.BlockSpec((B, hw), lambda i: (i, 0)),
                ),
                compiler_params=pltpu.CompilerParams(
                    dimension_semantics=("parallel",),
                    vmem_limit_bytes=vmem_limit,
                ),
                cost_estimate=pl.CostEstimate(
                    flops=int(2 * nc * hw * hw),
                    transcendentals=0,
                    bytes_accessed=int(2 * nc * hw * itemsize + hw * hw * c_itemsize),
                ),
            )

        try:
            out2 = build(True)(x2, kt)
        except Exception:
            # pl.Buffered(1) (single-buffered resident constant) rejected by
            # this JAX/Mosaic: constants are small, default buffering is fine.
            out2 = build(False)(x2, kt)
        return out2.reshape(N, C, H, W)

    # Larger spatial sizes: separable two-tall-matmul path (mem-bound regime).
    rt = jnp.asarray(np.ascontiguousarray(R.T), dtype=const_dtype)   # (H_in, H_out)
    ct = jnp.asarray(np.ascontiguousarray(Cm.T), dtype=const_dtype)  # (W_in, W_out)
    slab_bytes = hw * itemsize
    B = _choose_batch(nc, slab_bytes, sublane_mult, need_aligned=False)
    grid = (nc // B,)
    x3 = x.reshape(nc, H, W)
    vmem_limit = _vmem_limit_bytes(B * hw * itemsize,
                                   (H * H + W * W) * c_itemsize)

    def build_sep(kernel, single_buffer_consts):
        return pl.pallas_call(
            kernel,
            out_shape=jax.ShapeDtypeStruct((nc, H, W), x.dtype),
            grid_spec=pltpu.PrefetchScalarGridSpec(
                num_scalar_prefetch=0,
                grid=grid,
                in_specs=[
                    pl.BlockSpec((B, H, W), lambda i: (i, 0, 0)),
                    _resident_spec((H, H), single_buffer_consts),
                    _resident_spec((W, W), single_buffer_consts),
                ],
                out_specs=pl.BlockSpec((B, H, W), lambda i: (i, 0, 0)),
            ),
            compiler_params=pltpu.CompilerParams(
                dimension_semantics=("parallel",),
                vmem_limit_bytes=vmem_limit,
            ),
            cost_estimate=pl.CostEstimate(
                flops=int(2 * nc * (H * W * W + H * H * W)),
                transcendentals=0,
                bytes_accessed=int(2 * nc * hw * itemsize
                                   + (H * H + W * W) * c_itemsize),
            ),
        )

    try:
        out3 = build_sep(_sep_kernel_fused, True)(x3, rt, ct)
    except Exception:
        # Fallback if pl.Buffered(1) or the fused kernel's batched transposes
        # fail to lower on the installed JAX/Mosaic.
        out3 = build_sep(_sep_kernel_loop, False)(x3, rt, ct)
    return out3.reshape(N, C, H, W)


# ---------------------------------------------------------------------------
# Pure-JAX reference (mirror of the PyTorch forward, non-fast path, auto_pad).
# ---------------------------------------------------------------------------

def _reference_avgpool(x, kernel_size):
    N, C, H, W = x.shape
    k1 = min(H, kernel_size[0])
    k2 = min(W, kernel_size[1])
    s = jnp.cumsum(jnp.cumsum(x, axis=-1), axis=-2)
    s = jnp.pad(s, ((0, 0), (0, 0), (1, 0), (1, 0)))
    s1 = s[:, :, :-k1, :-k2]
    s2 = s[:, :, :-k1, k2:]
    s3 = s[:, :, k1:, :-k2]
    s4 = s[:, :, k1:, k2:]
    out = (s4 + s1 - s2 - s3) / (k1 * k2)
    _h, _w = out.shape[2:]
    pad2d = ((H - _h) // 2, (H - _h + 1) // 2, (W - _w) // 2, (W - _w + 1) // 2)
    out = jnp.pad(
        out,
        ((0, 0), (0, 0), (pad2d[0], pad2d[1]), (pad2d[2], pad2d[3])),
        mode="edge",
    )
    return out


if __name__ == "__main__":
    kernel_size = (7, 7)

    # Small-spatial case -> lane-dense Kronecker single-matmul path (f32).
    x = jax.random.normal(jax.random.PRNGKey(0), (2, 4, 16, 16), dtype=jnp.float32)
    out = jax.block_until_ready(avg_pool2d(x, kernel_size, auto_pad=True))
    ref = _reference_avgpool(x, kernel_size)
    assert out.shape == ref.shape == x.shape, (out.shape, ref.shape)
    np.testing.assert_allclose(np.asarray(out), np.asarray(ref), atol=1e-4, rtol=1e-4)

    # Larger-spatial case -> separable fused two-tall-matmul path (f32).
    x2 = jax.random.normal(jax.random.PRNGKey(1), (1, 4, 64, 64), dtype=jnp.float32)
    out2 = jax.block_until_ready(avg_pool2d(x2, kernel_size, auto_pad=True))
    ref2 = _reference_avgpool(x2, kernel_size)
    assert out2.shape == ref2.shape == x2.shape
    np.testing.assert_allclose(np.asarray(out2), np.asarray(ref2), atol=1e-3, rtol=1e-3)

    # bf16 input -> constants materialized in bf16 (native MXU rate), f32 accum.
    xb = jax.random.normal(jax.random.PRNGKey(2), (2, 4, 16, 16), dtype=jnp.bfloat16)
    outb = jax.block_until_ready(avg_pool2d(xb, kernel_size, auto_pad=True))
    refb = _reference_avgpool(xb.astype(jnp.float32), kernel_size)
    np.testing.assert_allclose(np.asarray(outb).astype(np.float32),
                               np.asarray(refb), atol=3e-2, rtol=3e-2)

    print("KERNEL_OK")
</pallas_src>

<mosaic_0001>
module attributes {stable_mosaic.version = 11 : i64} {
  func.func @_kron_kernel(%arg0: i32, %arg1: memref<8x256xf32, #tpu.memory_space<vmem>>, %arg2: memref<256x256xf32, #tpu.memory_space<vmem>>, %arg3: memref<8x256xf32, #tpu.memory_space<vmem>>) attributes {dimension_semantics = [#tpu.dimension_semantics<parallel>], iteration_bounds = array<i64: 1>, scalar_prefetch = 0 : i64, scratch_operands = 0 : i64, tpu.core_type = #tpu.core_type<tc>, window_params = [{transform_indices = @transform_0, window_bounds = array<i64: 8, 256>}, {pipeline_mode = #tpu.pipeline_mode<synchronous>, transform_indices = @transform_1, window_bounds = array<i64: 256, 256>}, {transform_indices = @transform_2, window_bounds = array<i64: 8, 256>}]} {
    %c0 = arith.constant 0 : index
    %c0_0 = arith.constant 0 : index
    %0 = vector.load %arg1[%c0, %c0_0] : memref<8x256xf32, #tpu.memory_space<vmem>>, vector<8x256xf32>
    %c0_1 = arith.constant 0 : index
    %c0_2 = arith.constant 0 : index
    %1 = vector.load %arg2[%c0_1, %c0_2] : memref<256x256xf32, #tpu.memory_space<vmem>>, vector<256x256xf32>
    %cst = arith.constant dense<0.000000e+00> : vector<8x256xf32>
    %2 = tpu.matmul %0, %1, %cst {dimension_numbers = #tpu.dot_dimension_numbers<[1], [0], [0], [1], [0, 0, 1, 1], [], []>} : vector<8x256xf32>, vector<256x256xf32>, vector<8x256xf32> -> vector<8x256xf32>
    %c0_3 = arith.constant 0 : index
    %c0_4 = arith.constant 0 : index
    %3 = vector.load %arg3[%c0_3, %c0_4] : memref<8x256xf32, #tpu.memory_space<vmem>>, vector<8x256xf32>
    tpu.vector_store %arg3[%c0_3, %c0_4], %2 {strides = array<i32>} : memref<8x256xf32, #tpu.memory_space<vmem>>, vector<8x256xf32>,
    return
  }
  func.func @transform_0(%arg0: i32) -> (i32, i32) {
    %c0_i32 = arith.constant 0 : i32
    %c0_i32_0 = arith.constant 0 : i32
    return %arg0, %c0_i32 : i32, i32
  }
  func.func @transform_1(%arg0: i32) -> (i32, i32) {
    %c0_i32 = arith.constant 0 : i32
    %c0_i32_0 = arith.constant 0 : i32
    %c0_i32_1 = arith.constant 0 : i32
    return %c0_i32, %c0_i32_0 : i32, i32
  }
  func.func @transform_2(%arg0: i32) -> (i32, i32) {
    %c0_i32 = arith.constant 0 : i32
    %c0_i32_0 = arith.constant 0 : i32
    return %arg0, %c0_i32 : i32, i32
  }
}

module attributes {stable_mosaic.version = 11 : i64} {
  func.func @_kron_kernel(%arg0: i32, %arg1: memref<8x256xf32, #tpu.memory_space<vmem>>, %arg2: memref<256x256xf32, #tpu.memory_space<vmem>>, %arg3: memref<8x256xf32, #tpu.memory_space<vmem>>) attributes {dimension_semantics = [#tpu.dimension_semantics<parallel>], iteration_bounds = array<i64: 1>, scalar_prefetch = 0 : i64, scratch_operands = 0 : i64, tpu.core_type = #tpu.core_type<tc>, window_params = [{transform_indices = @transform_0, window_bounds = array<i64: 8, 256>}, {pipeline_mode = #tpu.pipeline_mode<synchronous>, transform_indices = @transform_1, window_bounds = array<i64: 256, 256>}, {transform_indices = @transform_2, window_bounds = array<i64: 8, 256>}]} {
    %c0 = arith.constant 0 : index
    %c0_0 = arith.constant 0 : index
    %0 = vector.load %arg1[%c0, %c0_0] : memref<8x256xf32, #tpu.memory_space<vmem>>, vector<8x256xf32>
    %c0_1 = arith.constant 0 : index
    %c0_2 = arith.constant 0 : index
    %1 = vector.load %arg2[%c0_1, %c0_2] : memref<256x256xf32, #tpu.memory_space<vmem>>, vector<256x256xf32>
    %cst = arith.constant dense<0.000000e+00> : vector<8x256xf32>
    %2 = tpu.matmul %0, %1, %cst {dimension_numbers = #tpu.dot_dimension_numbers<[1], [0], [0], [1], [0, 0, 1, 1], [], []>} : vector<8x256xf32>, vector<256x256xf32>, vector<8x256xf32> -> vector<8x256xf32>
    %c0_3 = arith.constant 0 : index
    %c0_4 = arith.constant 0 : index
    %3 = vector.load %arg3[%c0_3, %c0_4] : memref<8x256xf32, #tpu.memory_space<vmem>>, vector<8x256xf32>
    tpu.vector_store %arg3[%c0_3, %c0_4], %2 {strides = array<i32>} : memref<8x256xf32, #tpu.memory_space<vmem>>, vector<8x256xf32>,
    return
  }
  func.func @transform_0(%arg0: i32) -> (i32, i32) {
    %c0_i32 = arith.constant 0 : i32
    %c0_i32_0 = arith.constant 0 : i32
    return %arg0, %c0_i32 : i32, i32
  }
  func.func @transform_1(%arg0: i32) -> (i32, i32) {
    %c0_i32 = arith.constant 0 : i32
    %c0_i32_0 = arith.constant 0 : i32
    %c0_i32_1 = arith.constant 0 : i32
    return %c0_i32, %c0_i32_0 : i32, i32
  }
  func.func @transform_2(%arg0: i32) -> (i32, i32) {
    %c0_i32 = arith.constant 0 : i32
    %c0_i32_0 = arith.constant 0 : i32
    return %arg0, %c0_i32 : i32, i32
  }
}

</mosaic_0001>

<llo_original>
// kernel: tpu_custom_call.1
$region0: #{tpu_custom_call.1}
  #allocation0 [shape = 'u32[]', space=smem, size = 0x4, offset = 0x4, fixed_abs, tag = 'smem constant byte address 0x4 - core index']
  #allocation1 [shape = 'u32[144,128]{1,0:T(1,128)}', space=vmem, size = 0x12000, scoped, tag = 'internal scratch']
  %s0 = inlined_call_operand.hbm [shape: f32[8,256], index: 0, kind: input, shape index: {}]
  %s1 = inlined_call_operand.hbm [shape: f32[256,256], index: 1, kind: input, shape index: {}]
  %s2 = inlined_call_operand.hbm [shape: f32[8,256], index: 2, kind: output, shape index: {}]
  %s3 = sld [smem:[#allocation0]]
  $region26: #{tpu_custom_call.1} parent=0
    _
  %s5 = ssub.s32 1, %s3
  %s6 = scalar_select 0, %s5, %s3
  $region1: #{tpu_custom_call.1} parent=0
    #allocation2 [shape = 'u8[8192]{0}', space=vmem, size = 0x2000, scoped, tag = 'input window, operand 0, single buffered']
    #allocation3 [shape = 's32[1]{0}', space=sflag, size = 0x4, scoped, tag = 'scoped memory for tpu_custom_call.1']
    #allocation4 [shape = 's32[1]{0}', space=sflag, size = 0x4, scoped, tag = 'scoped memory for tpu_custom_call.1']
    #allocation5 [shape = 'u8[262144]{0}', space=vmem, size = 0x40000, scoped, tag = 'input window, operand 1, single buffered']
    #allocation6 [shape = 's32[1]{0}', space=sflag, size = 0x4, scoped, tag = 'scoped memory for tpu_custom_call.1']
    #allocation7 [shape = 'u8[8192]{0}', space=vmem, size = 0x2000, scoped, tag = 'output window, operand 0, single buffered']
    %7 = vsyncpa [#allocation3], 0
    %8 = vsyncpa [#allocation6], 0
    %9 = vsyncpa [#allocation4], 0
    // Predicated region
    $region2: #{tpu_custom_call.1} parent=1 // pred_check
      _
    $region3: #{tpu_custom_call.1} parent=1 // pred_check_branch
      %11 = sbr.rel (0) target = $region5
    $region4: #{tpu_custom_call.1} parent=1 // pred_region
      %s13 = ssub.s32 256, 256
      %14 = vsyncadd [#allocation3], %s13
      %s16 = sshll.u32 [#allocation2], 4
      %s17 = int_to_ptr.vmem [resolvable:$true] %s16
      %19 = dma.hbm_to_vmem [thread:$0]  %s0, 256, %s17, [#allocation3]
    $region5: #{tpu_custom_call.1} parent=1 // pred_fallthru
      _
    // Predicated region
    $region6: #{tpu_custom_call.1} parent=1 // pred_check
      _
    $region7: #{tpu_custom_call.1} parent=1 // pred_check_branch
      %21 = sbr.rel (0) target = $region9
    $region8: #{tpu_custom_call.1} parent=1 // pred_region
      %s23 = ssub.s32 8192, 8192
      %24 = vsyncadd [#allocation6], %s23
      %s25 = sshll.u32 [#allocation5], 4
      %s26 = int_to_ptr.vmem [resolvable:$true] %s25
      %31 = dma.hbm_to_vmem [thread:$0]  %s1, 8192, %s26, [#allocation6], 256, 256, 16
    $region9: #{tpu_custom_call.1} parent=1 // pred_fallthru
      _
    // Predicated region
    $region10: #{tpu_custom_call.1} parent=1 // pred_check
      _
    $region11: #{tpu_custom_call.1} parent=1 // pred_check_branch
      %33 = sbr.rel (0) target = $region13
    $region12: #{tpu_custom_call.1} parent=1 // pred_region
      %34 = dma.done [#allocation3], 256
    $region13: #{tpu_custom_call.1} parent=1 // pred_fallthru
      _
    // Predicated region
    $region14: #{tpu_custom_call.1} parent=1 // pred_check
      _
    $region15: #{tpu_custom_call.1} parent=1 // pred_check_branch
      %36 = sbr.rel (0) target = $region17
    $region16: #{tpu_custom_call.1} parent=1 // pred_region
      %37 = dma.done [#allocation6], 8192
    $region17: #{tpu_custom_call.1} parent=1 // pred_fallthru
      _
    %v38 = vld [vmem:[#allocation2] sm:$0xff]
    %v39 = vld [vmem:[#allocation2 + $0x8] sm:$0xff]
    %v40 = vld [vmem:[#allocation5] sm:$0xff]
    %v41 = vld [vmem:[#allocation5 + $0x8] sm:$0xff]
    %v42 = vld [vmem:[#allocation5 + $0x10] sm:$0xff]
    %v43 = vld [vmem:[#allocation5 + $0x18] sm:$0xff]
    %v44 = vld [vmem:[#allocation5 + $0x20] sm:$0xff]
    %v45 = vld [vmem:[#allocation5 + $0x28] sm:$0xff]
    %v46 = vld [vmem:[#allocation5 + $0x30] sm:$0xff]
    %v47 = vld [vmem:[#allocation5 + $0x38] sm:$0xff]
    %v48 = vld [vmem:[#allocation5 + $0x40] sm:$0xff]
    %v49 = vld [vmem:[#allocation5 + $0x48] sm:$0xff]
    %v50 = vld [vmem:[#allocation5 + $0x50] sm:$0xff]
    %v51 = vld [vmem:[#allocation5 + $0x58] sm:$0xff]
    %v52 = vld [vmem:[#allocation5 + $0x60] sm:$0xff]
    %v53 = vld [vmem:[#allocation5 + $0x68] sm:$0xff]
    %v54 = vld [vmem:[#allocation5 + $0x70] sm:$0xff]
    %v55 = vld [vmem:[#allocation5 + $0x78] sm:$0xff]
    %v56 = vld [vmem:[#allocation5 + $0x80] sm:$0xff]
    %v57 = vld [vmem:[#allocation5 + $0x88] sm:$0xff]
    %v58 = vld [vmem:[#allocation5 + $0x90] sm:$0xff]
    %v59 = vld [vmem:[#allocation5 + $0x98] sm:$0xff]
    %v60 = vld [vmem:[#allocation5 + $0xa0] sm:$0xff]
    %v61 = vld [vmem:[#allocation5 + $0xa8] sm:$0xff]
    %v62 = vld [vmem:[#allocation5 + $0xb0] sm:$0xff]
    %v63 = vld [vmem:[#allocation5 + $0xb8] sm:$0xff]
    %v64 = vld [vmem:[#allocation5 + $0xc0] sm:$0xff]
    %v65 = vld [vmem:[#allocation5 + $0xc8] sm:$0xff]
    %v66 = vld [vmem:[#allocation5 + $0xd0] sm:$0xff]
    %v67 = vld [vmem:[#allocation5 + $0xd8] sm:$0xff]
    %v68 = vld [vmem:[#allocation5 + $0xe0] sm:$0xff]
    %v69 = vld [vmem:[#allocation5 + $0xe8] sm:$0xff]
    %v70 = vld [vmem:[#allocation5 + $0xf0] sm:$0xff]
    %v71 = vld [vmem:[#allocation5 + $0xf8] sm:$0xff]
    %v72 = vld [vmem:[#allocation5 + $0x100] sm:$0xff]
    %v73 = vld [vmem:[#allocation5 + $0x108] sm:$0xff]
    %v74 = vld [vmem:[#allocation5 + $0x110] sm:$0xff]
    %v75 = vld [vmem:[#allocation5 + $0x118] sm:$0xff]
    %v76 = vld [vmem:[#allocation5 + $0x120] sm:$0xff]
    %v77 = vld [vmem:[#allocation5 + $0x128] sm:$0xff]
    %v78 = vld [vmem:[#allocation5 + $0x130] sm:$0xff]
    %v79 = vld [vmem:[#allocation5 + $0x138] sm:$0xff]
    %v80 = vld [vmem:[#allocation5 + $0x140] sm:$0xff]
    %v81 = vld [vmem:[#allocation5 + $0x148] sm:$0xff]
    %v82 = vld [vmem:[#allocation5 + $0x150] sm:$0xff]
    %v83 = vld [vmem:[#allocation5 + $0x158] sm:$0xff]
    %v84 = vld [vmem:[#allocation5 + $0x160] sm:$0xff]
    %v85 = vld [vmem:[#allocation5 + $0x168] sm:$0xff]
    %v86 = vld [vmem:[#allocation5 + $0x170] sm:$0xff]
    %v87 = vld [vmem:[#allocation5 + $0x178] sm:$0xff]
    %v88 = vld [vmem:[#allocation5 + $0x180] sm:$0xff]
    %v89 = vld [vmem:[#allocation5 + $0x188] sm:$0xff]
    %v90 = vld [vmem:[#allocation5 + $0x190] sm:$0xff]
    %v91 = vld [vmem:[#allocation5 + $0x198] sm:$0xff]
    %v92 = vld [vmem:[#allocation5 + $0x1a0] sm:$0xff]
    %v93 = vld [vmem:[#allocation5 + $0x1a8] sm:$0xff]
    %v94 = vld [vmem:[#allocation5 + $0x1b0] sm:$0xff]
    %v95 = vld [vmem:[#allocation5 + $0x1b8] sm:$0xff]
    %v96 = vld [vmem:[#allocation5 + $0x1c0] sm:$0xff]
    %v97 = vld [vmem:[#allocation5 + $0x1c8] sm:$0xff]
    %v98 = vld [vmem:[#allocation5 + $0x1d0] sm:$0xff]
    %v99 = vld [vmem:[#allocation5 + $0x1d8] sm:$0xff]
    %v100 = vld [vmem:[#allocation5 + $0x1e0] sm:$0xff]
    %v101 = vld [vmem:[#allocation5 + $0x1e8] sm:$0xff]
    %v102 = vld [vmem:[#allocation5 + $0x1f0] sm:$0xff]
    %v103 = vld [vmem:[#allocation5 + $0x1f8] sm:$0xff]
    %104 = vmatprep.subr.mxu0 %v71
    %105 = vmatpush1.msra.mxu0 %v70
    %106 = vmatprep.subr.mxu0 %v69
    %107 = vmatpush1.msra.mxu0 %v68
    %108 = vmatprep.subr.mxu0 %v67
    %109 = vmatpush1.msra.mxu0 %v66
    %110 = vmatprep.subr.mxu0 %v65
    %111 = vmatpush1.msra.mxu0 %v64
    %112 = vmatprep.subr.mxu0 %v63
    %113 = vmatpush1.msra.mxu0 %v62
    %114 = vmatprep.subr.mxu0 %v61
    %115 = vmatpush1.msra.mxu0 %v60
    %116 = vmatprep.subr.mxu0 %v59
    %117 = vmatpush1.msra.mxu0 %v58
    %118 = vmatprep.subr.mxu0 %v57
    %119 = vmatpush1.msra.mxu0 %v56
    %120 = vmatprep.subr.mxu0 %v55
    %121 = vmatpush1.msra.mxu0 %v54
    %122 = vmatprep.subr.mxu0 %v53
    %123 = vmatpush1.msra.mxu0 %v52
    %124 = vmatprep.subr.mxu0 %v51
    %125 = vmatpush1.msra.mxu0 %v50
    %126 = vmatprep.subr.mxu0 %v49
    %127 = vmatpush1.msra.mxu0 %v48
    %128 = vmatprep.subr.mxu0 %v47
    %129 = vmatpush1.msra.mxu0 %v46
    %130 = vmatprep.subr.mxu0 %v45
    %131 = vmatpush1.msra.mxu0 %v44
    %132 = vmatprep.subr.mxu0 %v43
    %133 = vmatpush1.msra.mxu0 %v42
    %134 = vmatprep.subr.mxu0 %v41
    %135 = vmatpush1.msra.mxu0 %v40
    %136 = vmatprep.subr.mxu0 %v103
    %137 = vmatpush2.msra.mxu0 %v102
    %138 = vmatprep.subr.mxu0 %v101
    %139 = vmatpush2.msra.mxu0 %v100
    %140 = vmatprep.subr.mxu0 %v99
    %141 = vmatpush2.msra.mxu0 %v98
    %142 = vmatprep.subr.mxu0 %v97
    %143 = vmatpush2.msra.mxu0 %v96
    %144 = vmatprep.subr.mxu0 %v95
    %145 = vmatpush2.msra.mxu0 %v94
    %146 = vmatprep.subr.mxu0 %v93
    %147 = vmatpush2.msra.mxu0 %v92
    %148 = vmatprep.subr.mxu0 %v91
    %149 = vmatpush2.msra.mxu0 %v90
    %150 = vmatprep.subr.mxu0 %v89
    %151 = vmatpush2.msra.mxu0 %v88
    %152 = vmatprep.subr.mxu0 %v87
    %153 = vmatpush2.msra.mxu0 %v86
    %154 = vmatprep.subr.mxu0 %v85
    %155 = vmatpush2.msra.mxu0 %v84
    %156 = vmatprep.subr.mxu0 %v83
    %157 = vmatpush2.msra.mxu0 %v82
    %158 = vmatprep.subr.mxu0 %v81
    %159 = vmatpush2.msra.mxu0 %v80
    %160 = vmatprep.subr.mxu0 %v79
    %161 = vmatpush2.msra.mxu0 %v78
    %162 = vmatprep.subr.mxu0 %v77
    %163 = vmatpush2.msra.mxu0 %v76
    %164 = vmatprep.subr.mxu0 %v75
    %165 = vmatpush2.msra.mxu0 %v74
    %166 = vmatprep.subr.mxu0 %v73
    %167 = vmatpush2.msra.mxu0 %v72
    %168 = vmatprep.mubr.f32.mxu0 %v39
    %169 = vmatmul.mubr.f32.gmra.mxu0 %v38
    %v170 = vpop.f32.mrf.mxu0
    %v171 = vadd.f32 0.0, %v170
    %v172 = vpop.f32.mrf.mxu0
    %v173 = vadd.f32 0.0, %v172
    %174 = vdwg.mxu0
    %175 = vst [vmem:[#allocation7] sm:$0xff] %v171
    %176 = vst [vmem:[#allocation7 + $0x8] sm:$0xff] %v173
    // Predicated region
    $region18: #{tpu_custom_call.1} parent=1 // pred_check
      _
    $region19: #{tpu_custom_call.1} parent=1 // pred_check_branch
      %178 = sbr.rel (0) target = $region21
    $region20: #{tpu_custom_call.1} parent=1 // pred_region
      %s180 = ssub.s32 256, 256
      %181 = vsyncadd [#allocation4], %s180
      %s183 = sshll.u32 [#allocation7], 4
      %s184 = int_to_ptr.vmem [resolvable:$true] %s183
      %186 = dma.vmem_to_hbm [thread:$0]  %s184, 256, %s2, [#allocation4]
    $region21: #{tpu_custom_call.1} parent=1 // pred_fallthru
      _
    // Predicated region
    $region22: #{tpu_custom_call.1} parent=1 // pred_check
      _
    $region23: #{tpu_custom_call.1} parent=1 // pred_check_branch
      %188 = sbr.rel (0) target = $region25
    $region24: #{tpu_custom_call.1} parent=1 // pred_region
      %189 = dma.done [#allocation4], 256
    $region25: #{tpu_custom_call.1} parent=1 // pred_fallthru
      _
    %190 = vsyncpa [#allocation3], 1
    %191 = vsyncpa [#allocation6], 1
    %192 = vsyncpa [#allocation4], 1

// kernel: tpu_custom_call.1
$region0: #{tpu_custom_call.1}
  #allocation0 [shape = 'u32[]', space=smem, size = 0x4, offset = 0x4, fixed_abs, tag = 'smem constant byte address 0x4 - core index']
  #allocation1 [shape = 'u32[144,128]{1,0:T(1,128)}', space=vmem, size = 0x12000, scoped, tag = 'internal scratch']
  %s0 = inlined_call_operand.hbm [shape: f32[8,256], index: 0, kind: input, shape index: {}]
  %s1 = inlined_call_operand.hbm [shape: f32[256,256], index: 1, kind: input, shape index: {}]
  %s2 = inlined_call_operand.hbm [shape: f32[8,256], index: 2, kind: output, shape index: {}]
  %s3 = sld [smem:[#allocation0]]
  $region26: #{tpu_custom_call.1} parent=0
    _
  %s5 = ssub.s32 1, %s3
  %s6 = scalar_select 0, %s5, %s3
  $region1: #{tpu_custom_call.1} parent=0
    #allocation2 [shape = 'u8[8192]{0}', space=vmem, size = 0x2000, scoped, tag = 'input window, operand 0, single buffered']
    #allocation3 [shape = 's32[1]{0}', space=sflag, size = 0x4, scoped, tag = 'scoped memory for tpu_custom_call.1']
    #allocation4 [shape = 's32[1]{0}', space=sflag, size = 0x4, scoped, tag = 'scoped memory for tpu_custom_call.1']
    #allocation5 [shape = 'u8[262144]{0}', space=vmem, size = 0x40000, scoped, tag = 'input window, operand 1, single buffered']
    #allocation6 [shape = 's32[1]{0}', space=sflag, size = 0x4, scoped, tag = 'scoped memory for tpu_custom_call.1']
    #allocation7 [shape = 'u8[8192]{0}', space=vmem, size = 0x2000, scoped, tag = 'output window, operand 0, single buffered']
    %7 = vsyncpa [#allocation3], 0
    %8 = vsyncpa [#allocation6], 0
    %9 = vsyncpa [#allocation4], 0
    // Predicated region
    $region2: #{tpu_custom_call.1} parent=1 // pred_check
      _
    $region3: #{tpu_custom_call.1} parent=1 // pred_check_branch
      %11 = sbr.rel (0) target = $region5
    $region4: #{tpu_custom_call.1} parent=1 // pred_region
      %s13 = ssub.s32 256, 256
      %14 = vsyncadd [#allocation3], %s13
      %s16 = sshll.u32 [#allocation2], 4
      %s17 = int_to_ptr.vmem [resolvable:$true] %s16
      %19 = dma.hbm_to_vmem [thread:$0]  %s0, 256, %s17, [#allocation3]
    $region5: #{tpu_custom_call.1} parent=1 // pred_fallthru
      _
    // Predicated region
    $region6: #{tpu_custom_call.1} parent=1 // pred_check
      _
    $region7: #{tpu_custom_call.1} parent=1 // pred_check_branch
      %21 = sbr.rel (0) target = $region9
    $region8: #{tpu_custom_call.1} parent=1 // pred_region
      %s23 = ssub.s32 8192, 8192
      %24 = vsyncadd [#allocation6], %s23
      %s25 = sshll.u32 [#allocation5], 4
      %s26 = int_to_ptr.vmem [resolvable:$true] %s25
      %31 = dma.hbm_to_vmem [thread:$0]  %s1, 8192, %s26, [#allocation6], 256, 256, 16
    $region9: #{tpu_custom_call.1} parent=1 // pred_fallthru
      _
    // Predicated region
    $region10: #{tpu_custom_call.1} parent=1 // pred_check
      _
    $region11: #{tpu_custom_call.1} parent=1 // pred_check_branch
      %33 = sbr.rel (0) target = $region13
    $region12: #{tpu_custom_call.1} parent=1 // pred_region
      %34 = dma.done [#allocation3], 256
    $region13: #{tpu_custom_call.1} parent=1 // pred_fallthru
      _
    // Predicated region
    $region14: #{tpu_custom_call.1} parent=1 // pred_check
      _
    $region15: #{tpu_custom_call.1} parent=1 // pred_check_branch
      %36 = sbr.rel (0) target = $region17
    $region16: #{tpu_custom_call.1} parent=1 // pred_region
      %37 = dma.done [#allocation6], 8192
    $region17: #{tpu_custom_call.1} parent=1 // pred_fallthru
      _
    %v38 = vld [vmem:[#allocation2] sm:$0xff]
    %v39 = vld [vmem:[#allocation2 + $0x8] sm:$0xff]
    %v40 = vld [vmem:[#allocation5] sm:$0xff]
    %v41 = vld [vmem:[#allocation5 + $0x8] sm:$0xff]
    %v42 = vld [vmem:[#allocation5 + $0x10] sm:$0xff]
    %v43 = vld [vmem:[#allocation5 + $0x18] sm:$0xff]
    %v44 = vld [vmem:[#allocation5 + $0x20] sm:$0xff]
    %v45 = vld [vmem:[#allocation5 + $0x28] sm:$0xff]
    %v46 = vld [vmem:[#allocation5 + $0x30] sm:$0xff]
    %v47 = vld [vmem:[#allocation5 + $0x38] sm:$0xff]
    %v48 = vld [vmem:[#allocation5 + $0x40] sm:$0xff]
    %v49 = vld [vmem:[#allocation5 + $0x48] sm:$0xff]
    %v50 = vld [vmem:[#allocation5 + $0x50] sm:$0xff]
    %v51 = vld [vmem:[#allocation5 + $0x58] sm:$0xff]
    %v52 = vld [vmem:[#allocation5 + $0x60] sm:$0xff]
    %v53 = vld [vmem:[#allocation5 + $0x68] sm:$0xff]
    %v54 = vld [vmem:[#allocation5 + $0x70] sm:$0xff]
    %v55 = vld [vmem:[#allocation5 + $0x78] sm:$0xff]
    %v56 = vld [vmem:[#allocation5 + $0x80] sm:$0xff]
    %v57 = vld [vmem:[#allocation5 + $0x88] sm:$0xff]
    %v58 = vld [vmem:[#allocation5 + $0x90] sm:$0xff]
    %v59 = vld [vmem:[#allocation5 + $0x98] sm:$0xff]
    %v60 = vld [vmem:[#allocation5 + $0xa0] sm:$0xff]
    %v61 = vld [vmem:[#allocation5 + $0xa8] sm:$0xff]
    %v62 = vld [vmem:[#allocation5 + $0xb0] sm:$0xff]
    %v63 = vld [vmem:[#allocation5 + $0xb8] sm:$0xff]
    %v64 = vld [vmem:[#allocation5 + $0xc0] sm:$0xff]
    %v65 = vld [vmem:[#allocation5 + $0xc8] sm:$0xff]
    %v66 = vld [vmem:[#allocation5 + $0xd0] sm:$0xff]
    %v67 = vld [vmem:[#allocation5 + $0xd8] sm:$0xff]
    %v68 = vld [vmem:[#allocation5 + $0xe0] sm:$0xff]
    %v69 = vld [vmem:[#allocation5 + $0xe8] sm:$0xff]
    %v70 = vld [vmem:[#allocation5 + $0xf0] sm:$0xff]
    %v71 = vld [vmem:[#allocation5 + $0xf8] sm:$0xff]
    %v72 = vld [vmem:[#allocation5 + $0x100] sm:$0xff]
    %v73 = vld [vmem:[#allocation5 + $0x108] sm:$0xff]
    %v74 = vld [vmem:[#allocation5 + $0x110] sm:$0xff]
    %v75 = vld [vmem:[#allocation5 + $0x118] sm:$0xff]
    %v76 = vld [vmem:[#allocation5 + $0x120] sm:$0xff]
    %v77 = vld [vmem:[#allocation5 + $0x128] sm:$0xff]
    %v78 = vld [vmem:[#allocation5 + $0x130] sm:$0xff]
    %v79 = vld [vmem:[#allocation5 + $0x138] sm:$0xff]
    %v80 = vld [vmem:[#allocation5 + $0x140] sm:$0xff]
    %v81 = vld [vmem:[#allocation5 + $0x148] sm:$0xff]
    %v82 = vld [vmem:[#allocation5 + $0x150] sm:$0xff]
    %v83 = vld [vmem:[#allocation5 + $0x158] sm:$0xff]
    %v84 = vld [vmem:[#allocation5 + $0x160] sm:$0xff]
    %v85 = vld [vmem:[#allocation5 + $0x168] sm:$0xff]
    %v86 = vld [vmem:[#allocation5 + $0x170] sm:$0xff]
    %v87 = vld [vmem:[#allocation5 + $0x178] sm:$0xff]
    %v88 = vld [vmem:[#allocation5 + $0x180] sm:$0xff]
    %v89 = vld [vmem:[#allocation5 + $0x188] sm:$0xff]
    %v90 = vld [vmem:[#allocation5 + $0x190] sm:$0xff]
    %v91 = vld [vmem:[#allocation5 + $0x198] sm:$0xff]
    %v92 = vld [vmem:[#allocation5 + $0x1a0] sm:$0xff]
    %v93 = vld [vmem:[#allocation5 + $0x1a8] sm:$0xff]
    %v94 = vld [vmem:[#allocation5 + $0x1b0] sm:$0xff]
    %v95 = vld [vmem:[#allocation5 + $0x1b8] sm:$0xff]
    %v96 = vld [vmem:[#allocation5 + $0x1c0] sm:$0xff]
    %v97 = vld [vmem:[#allocation5 + $0x1c8] sm:$0xff]
    %v98 = vld [vmem:[#allocation5 + $0x1d0] sm:$0xff]
    %v99 = vld [vmem:[#allocation5 + $0x1d8] sm:$0xff]
    %v100 = vld [vmem:[#allocation5 + $0x1e0] sm:$0xff]
    %v101 = vld [vmem:[#allocation5 + $0x1e8] sm:$0xff]
    %v102 = vld [vmem:[#allocation5 + $0x1f0] sm:$0xff]
    %v103 = vld [vmem:[#allocation5 + $0x1f8] sm:$0xff]
    %104 = vmatprep.subr.mxu0 %v71
    %105 = vmatpush1.msra.mxu0 %v70
    %106 = vmatprep.subr.mxu0 %v69
    %107 = vmatpush1.msra.mxu0 %v68
    %108 = vmatprep.subr.mxu0 %v67
    %109 = vmatpush1.msra.mxu0 %v66
    %110 = vmatprep.subr.mxu0 %v65
    %111 = vmatpush1.msra.mxu0 %v64
    %112 = vmatprep.subr.mxu0 %v63
    %113 = vmatpush1.msra.mxu0 %v62
    %114 = vmatprep.subr.mxu0 %v61
    %115 = vmatpush1.msra.mxu0 %v60
    %116 = vmatprep.subr.mxu0 %v59
    %117 = vmatpush1.msra.mxu0 %v58
    %118 = vmatprep.subr.mxu0 %v57
    %119 = vmatpush1.msra.mxu0 %v56
    %120 = vmatprep.subr.mxu0 %v55
    %121 = vmatpush1.msra.mxu0 %v54
    %122 = vmatprep.subr.mxu0 %v53
    %123 = vmatpush1.msra.mxu0 %v52
    %124 = vmatprep.subr.mxu0 %v51
    %125 = vmatpush1.msra.mxu0 %v50
    %126 = vmatprep.subr.mxu0 %v49
    %127 = vmatpush1.msra.mxu0 %v48
    %128 = vmatprep.subr.mxu0 %v47
    %129 = vmatpush1.msra.mxu0 %v46
    %130 = vmatprep.subr.mxu0 %v45
    %131 = vmatpush1.msra.mxu0 %v44
    %132 = vmatprep.subr.mxu0 %v43
    %133 = vmatpush1.msra.mxu0 %v42
    %134 = vmatprep.subr.mxu0 %v41
    %135 = vmatpush1.msra.mxu0 %v40
    %136 = vmatprep.subr.mxu0 %v103
    %137 = vmatpush2.msra.mxu0 %v102
    %138 = vmatprep.subr.mxu0 %v101
    %139 = vmatpush2.msra.mxu0 %v100
    %140 = vmatprep.subr.mxu0 %v99
    %141 = vmatpush2.msra.mxu0 %v98
    %142 = vmatprep.subr.mxu0 %v97
    %143 = vmatpush2.msra.mxu0 %v96
    %144 = vmatprep.subr.mxu0 %v95
    %145 = vmatpush2.msra.mxu0 %v94
    %146 = vmatprep.subr.mxu0 %v93
    %147 = vmatpush2.msra.mxu0 %v92
    %148 = vmatprep.subr.mxu0 %v91
    %149 = vmatpush2.msra.mxu0 %v90
    %150 = vmatprep.subr.mxu0 %v89
    %151 = vmatpush2.msra.mxu0 %v88
    %152 = vmatprep.subr.mxu0 %v87
    %153 = vmatpush2.msra.mxu0 %v86
    %154 = vmatprep.subr.mxu0 %v85
    %155 = vmatpush2.msra.mxu0 %v84
    %156 = vmatprep.subr.mxu0 %v83
    %157 = vmatpush2.msra.mxu0 %v82
    %158 = vmatprep.subr.mxu0 %v81
    %159 = vmatpush2.msra.mxu0 %v80
    %160 = vmatprep.subr.mxu0 %v79
    %161 = vmatpush2.msra.mxu0 %v78
    %162 = vmatprep.subr.mxu0 %v77
    %163 = vmatpush2.msra.mxu0 %v76
    %164 = vmatprep.subr.mxu0 %v75
    %165 = vmatpush2.msra.mxu0 %v74
    %166 = vmatprep.subr.mxu0 %v73
    %167 = vmatpush2.msra.mxu0 %v72
    %168 = vmatprep.mubr.f32.mxu0 %v39
    %169 = vmatmul.mubr.f32.gmra.mxu0 %v38
    %v170 = vpop.f32.mrf.mxu0
    %v171 = vadd.f32 0.0, %v170
    %v172 = vpop.f32.mrf.mxu0
    %v173 = vadd.f32 0.0, %v172
    %174 = vdwg.mxu0
    %175 = vst [vmem:[#allocation7] sm:$0xff] %v171
    %176 = vst [vmem:[#allocation7 + $0x8] sm:$0xff] %v173
    // Predicated region
    $region18: #{tpu_custom_call.1} parent=1 // pred_check
      _
    $region19: #{tpu_custom_call.1} parent=1 // pred_check_branch
      %178 = sbr.rel (0) target = $region21
    $region20: #{tpu_custom_call.1} parent=1 // pred_region
      %s180 = ssub.s32 256, 256
      %181 = vsyncadd [#allocation4], %s180
      %s183 = sshll.u32 [#allocation7], 4
      %s184 = int_to_ptr.vmem [resolvable:$true] %s183
      %186 = dma.vmem_to_hbm [thread:$0]  %s184, 256, %s2, [#allocation4]
    $region21: #{tpu_custom_call.1} parent=1 // pred_fallthru
      _
    // Predicated region
    $region22: #{tpu_custom_call.1} parent=1 // pred_check
      _
    $region23: #{tpu_custom_call.1} parent=1 // pred_check_branch
      %188 = sbr.rel (0) target = $region25
    $region24: #{tpu_custom_call.1} parent=1 // pred_region
      %189 = dma.done [#allocation4], 256
    $region25: #{tpu_custom_call.1} parent=1 // pred_fallthru
      _
    %190 = vsyncpa [#allocation3], 1
    %191 = vsyncpa [#allocation6], 1
    %192 = vsyncpa [#allocation4], 1

</llo_original>
